<compile_context>
chip_gen: v7x
topology: tpu7x:2x2x1
jax: 0.10.0
libtpu: 0.0.40
codegen_flags: <defaults>
</compile_context>

<pallas_src>
import functools
import math

import jax
import jax.numpy as jnp
from jax.experimental import pallas as pl
from jax.experimental.pallas import tpu as pltpu


# ---------------------------------------------------------------------------
# Generation-aware VMEM budget & tiling helpers
# ---------------------------------------------------------------------------
_VMEM_LIMIT_CACHE = []


def _vmem_limit_bytes():
    """Scoped-VMEM budget derived from the actual chip.

    v7x (64 MiB physical) -> ~40 MiB; v5e/v6e (128 MiB) -> ~80 MiB.  Returns
    None (keep compiler default) if the hardware query is unavailable."""
    if _VMEM_LIMIT_CACHE:
        return _VMEM_LIMIT_CACHE[0]
    try:
        cap = int(pltpu.get_tpu_info().vmem_capacity_bytes)
        limit = min((cap * 5) // 8, 96 * 1024 * 1024)
    except Exception:
        limit = None
    _VMEM_LIMIT_CACHE.append(limit)
    return limit


def _compiler_params(dimension_semantics):
    kw = dict(dimension_semantics=dimension_semantics)
    lim = _vmem_limit_bytes()
    if lim is not None:
        kw["vmem_limit_bytes"] = lim
    return pltpu.CompilerParams(**kw)


def _sublane_align(dtype):
    # Sub-32-bit dtypes pack along sublanes: f32 -> 8, bf16 -> 16, int8/fp8 -> 32.
    return max(8, 32 // jnp.dtype(dtype).itemsize)


def _pick_tile(dim, target, align):
    """Largest tile <= target that is a multiple of `align` and divides `dim`.

    Falls back to the full dimension (always a legal block size)."""
    if dim <= target:
        return dim
    t = (target // align) * align
    while t >= align:
        if dim % t == 0:
            return t
        t -= align
    return dim


# Use the un-tiled reduction (no f32 accumulator RMW) up to this contraction size.
_FULL_K_MAX = 2048


# ---------------------------------------------------------------------------
# Kernel 1: fused Q/K/V projection (single activation stream, stacked weights)
#   q/k/v = x @ W[i] + b[i]   (ada scale/bias and pos_bias_u already folded in)
# ---------------------------------------------------------------------------
def _qkv_fullk_kernel(x_ref, w_ref, b_ref, q_ref, k_ref, v_ref):
    x = x_ref[...]                                   # (tm, F_in), native dtype
    b = b_ref[...].astype(jnp.float32)               # (3, 1, tn)
    for idx, o in enumerate((q_ref, k_ref, v_ref)):
        acc = jnp.dot(x, w_ref[idx], preferred_element_type=jnp.float32)
        o[...] = (acc + b[idx]).astype(o.dtype)


def _qkv_acc_kernel(x_ref, w_ref, b_ref, q_ref, k_ref, v_ref, acc_ref):
    kk = pl.program_id(2)

    @pl.when(kk == 0)
    def _():
        acc_ref[...] = jnp.zeros_like(acc_ref)

    x = x_ref[...]
    for idx in range(3):
        acc_ref[idx] += jnp.dot(x, w_ref[idx],
                                preferred_element_type=jnp.float32)

    @pl.when(kk == pl.num_programs(2) - 1)
    def _():
        b = b_ref[...].astype(jnp.float32)
        q_ref[...] = (acc_ref[0] + b[0]).astype(q_ref.dtype)
        k_ref[...] = (acc_ref[1] + b[1]).astype(k_ref.dtype)
        v_ref[...] = (acc_ref[2] + b[2]).astype(v_ref.dtype)


def pallas_qkv_fused(x2d, w_stack, b_stack, *, tm_t=512, tn_t=256, tk_t=512):
    """x2d: (M, F); w_stack: (3, F, F); b_stack: (3, 1, F) -> (q, k, v) each (M, F)."""
    M, F_in = x2d.shape
    F_out = w_stack.shape[2]
    tm = _pick_tile(M, tm_t, _sublane_align(x2d.dtype))
    tn = _pick_tile(F_out, tn_t, 128)
    out_sd = jax.ShapeDtypeStruct((M, F_out), x2d.dtype)

    if F_in <= _FULL_K_MAX:
        # Full reduction in one MXU pass: no accumulator RMW, no init/finalize.
        # The weight-column axis (j) leads the grid so the (3, F, tn) weight block
        # stays VMEM-resident across all M tiles (weights streamed once).
        out_spec = pl.BlockSpec((tm, tn), lambda j, i: (i, j))
        return pl.pallas_call(
            _qkv_fullk_kernel,
            out_shape=(out_sd, out_sd, out_sd),
            grid_spec=pltpu.PrefetchScalarGridSpec(
                num_scalar_prefetch=0,
                grid=(F_out // tn, M // tm),
                in_specs=[
                    pl.BlockSpec((tm, F_in), lambda j, i: (i, 0)),
                    pl.BlockSpec((3, F_in, tn), lambda j, i: (0, 0, j)),
                    pl.BlockSpec((3, 1, tn), lambda j, i: (0, 0, j)),
                ],
                out_specs=(out_spec, out_spec, out_spec),
            ),
            compiler_params=_compiler_params(("parallel", "parallel")),
        )(x2d, w_stack, b_stack)

    # Very-large-F fallback: tile the reduction axis with an f32 VMEM accumulator.
    tk = _pick_tile(F_in, tk_t, 128)
    out_spec = pl.BlockSpec((tm, tn), lambda i, j, kk: (i, j))
    return pl.pallas_call(
        _qkv_acc_kernel,
        out_shape=(out_sd, out_sd, out_sd),
        grid_spec=pltpu.PrefetchScalarGridSpec(
            num_scalar_prefetch=0,
            grid=(M // tm, F_out // tn, F_in // tk),
            in_specs=[
                pl.BlockSpec((tm, tk), lambda i, j, kk: (i, kk)),
                pl.BlockSpec((3, tk, tn), lambda i, j, kk: (0, kk, j)),
                pl.BlockSpec((3, 1, tn), lambda i, j, kk: (0, 0, j)),
            ],
            out_specs=(out_spec, out_spec, out_spec),
            scratch_shapes=[pltpu.VMEM((3, tm, tn), jnp.float32)],
        ),
        compiler_params=_compiler_params(("parallel", "parallel", "arbitrary")),
    )(x2d, w_stack, b_stack)


# ---------------------------------------------------------------------------
# Kernel 2: generic tiled linear  y = x @ W + b  (used when q/k/v inputs differ)
# ---------------------------------------------------------------------------
def _linear_fullk_kernel(x_ref, w_ref, b_ref, o_ref):
    acc = jnp.dot(x_ref[...], w_ref[...], preferred_element_type=jnp.float32)
    o_ref[...] = (acc + b_ref[...].astype(jnp.float32)).astype(o_ref.dtype)


def _linear_acc_kernel(x_ref, w_ref, b_ref, o_ref, acc_ref):
    kk = pl.program_id(2)

    @pl.when(kk == 0)
    def _():
        acc_ref[...] = jnp.zeros_like(acc_ref)

    acc_ref[...] += jnp.dot(x_ref[...], w_ref[...],
                            preferred_element_type=jnp.float32)

    @pl.when(kk == pl.num_programs(2) - 1)
    def _():
        o_ref[...] = (acc_ref[...] + b_ref[...].astype(jnp.float32)
                      ).astype(o_ref.dtype)


def pallas_linear(x2d, w, b, *, tm_t=512, tn_t=256, tk_t=512):
    """x2d: (M, F_in); w: (F_in, F_out); b: (1, F_out)."""
    M, F_in = x2d.shape
    F_out = w.shape[1]
    tm = _pick_tile(M, tm_t, _sublane_align(x2d.dtype))
    tn = _pick_tile(F_out, tn_t, 128)
    out_sd = jax.ShapeDtypeStruct((M, F_out), x2d.dtype)

    if F_in <= _FULL_K_MAX:
        return pl.pallas_call(
            _linear_fullk_kernel,
            out_shape=out_sd,
            grid_spec=pltpu.PrefetchScalarGridSpec(
                num_scalar_prefetch=0,
                grid=(F_out // tn, M // tm),
                in_specs=[
                    pl.BlockSpec((tm, F_in), lambda j, i: (i, 0)),
                    pl.BlockSpec((F_in, tn), lambda j, i: (0, j)),
                    pl.BlockSpec((1, tn), lambda j, i: (0, j)),
                ],
                out_specs=pl.BlockSpec((tm, tn), lambda j, i: (i, j)),
            ),
            compiler_params=_compiler_params(("parallel", "parallel")),
        )(x2d, w, b)

    tk = _pick_tile(F_in, tk_t, 128)
    return pl.pallas_call(
        _linear_acc_kernel,
        out_shape=out_sd,
        grid_spec=pltpu.PrefetchScalarGridSpec(
            num_scalar_prefetch=0,
            grid=(M // tm, F_out // tn, F_in // tk),
            in_specs=[
                pl.BlockSpec((tm, tk), lambda i, j, kk: (i, kk)),
                pl.BlockSpec((tk, tn), lambda i, j, kk: (kk, j)),
                pl.BlockSpec((1, tn), lambda i, j, kk: (0, j)),
            ],
            out_specs=pl.BlockSpec((tm, tn), lambda i, j, kk: (i, j)),
            scratch_shapes=[pltpu.VMEM((tm, tn), jnp.float32)],
        ),
        compiler_params=_compiler_params(("parallel", "parallel", "arbitrary")),
    )(x2d, w, b)


# ---------------------------------------------------------------------------
# Kernel 3: flash-style attention + fused output projection, (B, T, F) layout.
#   per head h (online softmax over the kv grid axis):
#     s = q_h @ k_h^T / sqrt(d_k);  m/l/acc updated incrementally
#   finalize: out = sum_h (acc_h / l_h) @ Wo[h*dk:(h+1)*dk, :] + bo
#   (no head-concat relayout; lane-dense (1, tq, F) output write)
# ---------------------------------------------------------------------------
def _flash_attn_out_kernel(q_ref, k_ref, v_ref, wo_ref, bo_ref, o_ref,
                           m_ref, l_ref, acc_ref, *, n_head, d_k, inv_sqrt_dk):
    kv = pl.program_id(2)

    @pl.when(kv == 0)
    def _():
        m_ref[...] = jnp.full_like(m_ref, -jnp.inf)
        l_ref[...] = jnp.zeros_like(l_ref)
        acc_ref[...] = jnp.zeros_like(acc_ref)

    q = q_ref[0]                        # (tq,  F)
    k = k_ref[0]                        # (tkv, F)
    v = v_ref[0]                        # (tkv, F)

    # Static unrolled head loop (H is small).  pos_bias_u is already folded into
    # the q-projection bias in prepare_params().
    for h in range(n_head):
        lo = h * d_k
        qh = q[:, lo:lo + d_k]
        kh = k[:, lo:lo + d_k]
        vh = v[:, lo:lo + d_k]
        s = jax.lax.dot_general(
            qh, kh, (((1,), (1,)), ((), ())),
            preferred_element_type=jnp.float32) * inv_sqrt_dk          # (tq, tkv)
        m_prev = m_ref[h]                                              # (tq, 1)
        m_new = jnp.maximum(m_prev, jnp.max(s, axis=-1, keepdims=True))
        alpha = jnp.exp(m_prev - m_new)
        p = jnp.exp(s - m_new)
        l_ref[h] = alpha * l_ref[h] + jnp.sum(p, axis=-1, keepdims=True)
        acc_ref[h] = alpha * acc_ref[h] + jnp.dot(
            p.astype(vh.dtype), vh, preferred_element_type=jnp.float32)
        m_ref[h] = m_new

    @pl.when(kv == pl.num_programs(2) - 1)
    def _():
        tq = o_ref.shape[1]
        F = o_ref.shape[2]
        out = jnp.zeros((tq, F), jnp.float32)
        # Per-head output projection summed into `out` -- no jnp.concatenate of
        # head contexts, no (tq, F) ctx relayout.
        for h in range(n_head):
            ctx = acc_ref[h] / l_ref[h]                # exact softmax normalization
            wo_h = wo_ref[h * d_k:(h + 1) * d_k, :]    # sublane-aligned static slice
            out = out + jnp.dot(ctx.astype(wo_ref.dtype), wo_h,
                                preferred_element_type=jnp.float32)
        out = out + bo_ref[...].astype(jnp.float32)
        o_ref[0] = out.astype(o_ref.dtype)


def pallas_flash_attention_out(q, k, v, wo, bo, n_head, *, tq_t=256, tkv_t=512):
    """q: (B, Tq, F); k, v: (B, Tk, F); wo: (F, F); bo: (1, F) -> (B, Tq, F)."""
    B, Tq, F = q.shape
    Tk = k.shape[1]
    d_k = F // n_head
    align = _sublane_align(q.dtype)
    tq = _pick_tile(Tq, tq_t, align)
    tkv = _pick_tile(Tk, tkv_t, align)

    kern = functools.partial(_flash_attn_out_kernel, n_head=n_head, d_k=d_k,
                             inv_sqrt_dk=1.0 / math.sqrt(d_k))
    # Grid: (query tile, batch, kv tile).  The query-tile axis leads so work still
    # splits across both v7x TensorCores when B == 1; kv is the trailing
    # "arbitrary" reduction axis (output block resident across it).
    return pl.pallas_call(
        kern,
        out_shape=jax.ShapeDtypeStruct((B, Tq, F), q.dtype),
        grid_spec=pltpu.PrefetchScalarGridSpec(
            num_scalar_prefetch=0,
            grid=(Tq // tq, B, Tk // tkv),
            in_specs=[
                pl.BlockSpec((1, tq, F), lambda i, b, kv: (b, i, 0)),
                pl.BlockSpec((1, tkv, F), lambda i, b, kv: (b, kv, 0)),
                pl.BlockSpec((1, tkv, F), lambda i, b, kv: (b, kv, 0)),
                # TODO(synk): Wo/bo have constant block indices; mark them
                # pipeline_mode=pl.Buffered(1) to reclaim the redundant second
                # VMEM buffer once that knob is available in the deployed jax.
                pl.BlockSpec((F, F), lambda i, b, kv: (0, 0)),
                pl.BlockSpec((1, F), lambda i, b, kv: (0, 0)),
            ],
            out_specs=pl.BlockSpec((1, tq, F), lambda i, b, kv: (b, i, 0)),
            scratch_shapes=[
                pltpu.VMEM((n_head, tq, 1), jnp.float32),     # running max m
                pltpu.VMEM((n_head, tq, 1), jnp.float32),     # running sum l
                pltpu.VMEM((n_head, tq, d_k), jnp.float32),   # unnormalized ctx
            ],
        ),
        compiler_params=_compiler_params(("parallel", "parallel", "arbitrary")),
    )(q, k, v, wo, bo)


# ---------------------------------------------------------------------------
# Module wrapper
# ---------------------------------------------------------------------------
def init_params(key, n_head, n_feat):
    dk = n_feat // n_head
    ks = jax.random.split(key, 10)
    s = 0.1
    return {
        "n_head": n_head,
        "wq": s * jax.random.normal(ks[0], (n_feat, n_feat), jnp.float32),
        "bq": s * jax.random.normal(ks[1], (n_feat,), jnp.float32),
        "wk": s * jax.random.normal(ks[2], (n_feat, n_feat), jnp.float32),
        "bk": s * jax.random.normal(ks[3], (n_feat,), jnp.float32),
        "wv": s * jax.random.normal(ks[4], (n_feat, n_feat), jnp.float32),
        "bv": s * jax.random.normal(ks[5], (n_feat,), jnp.float32),
        "wo": s * jax.random.normal(ks[6], (n_feat, n_feat), jnp.float32),
        "bo": s * jax.random.normal(ks[7], (n_feat,), jnp.float32),
        "pos_bias_u": s * jax.random.normal(ks[8], (n_head, dk), jnp.float32),
        "pos_bias_v": s * jax.random.normal(ks[9], (n_head, dk), jnp.float32),
        "ada_scale": jnp.ones((1, 1, n_feat), jnp.float32),
        "ada_bias": jnp.zeros((1, 1, n_feat), jnp.float32),
    }


def prepare_params(params):
    """One-time parameter prep (hoisted out of the per-call path).

    Folds ada_scale/ada_bias into the projection weights
      (s*x + a) @ W + b == x @ (s[:,None]*W) + (a @ W + b)
    and pos_bias_u (a pure per-head additive bias on q) into the q bias, then
    stacks the three projections for the fused QKV kernel."""
    F = params["wq"].shape[0]
    scale = params["ada_scale"].reshape(F)
    abias = params["ada_bias"].reshape(F)

    def fold(w, b):
        return scale[:, None] * w, abias @ w + b

    wq, bq = fold(params["wq"], params["bq"])
    wk, bk = fold(params["wk"], params["bk"])
    wv, bv = fold(params["wv"], params["bv"])
    bq = bq + params["pos_bias_u"].reshape(F)
    # TODO(synk): pos_bias_v is unused in the reference forward pass.
    return {
        "n_head": params["n_head"],
        "w_qkv": jnp.stack([wq, wk, wv], axis=0),              # (3, F, F)
        "b_qkv": jnp.stack([bq, bk, bv], axis=0)[:, None, :],  # (3, 1, F)
        "wo": params["wo"],
        "bo": params["bo"][None, :],
    }


def multi_headed_attention(query, key, value, prep):
    B, T, F = query.shape
    H = prep["n_head"]
    assert F % H == 0

    xq = query.reshape(B * T, F)
    if (key is query) and (value is query):
        # Self-attention: read the activation once, emit q/k/v from one call.
        q2, k2, v2 = pallas_qkv_fused(xq, prep["w_qkv"], prep["b_qkv"])
    else:
        # TODO(synk): equal-but-distinct arrays take this 3-kernel path (perf only).
        q2 = pallas_linear(xq, prep["w_qkv"][0], prep["b_qkv"][0])
        k2 = pallas_linear(key.reshape(-1, F), prep["w_qkv"][1], prep["b_qkv"][1])
        v2 = pallas_linear(value.reshape(-1, F), prep["w_qkv"][2], prep["b_qkv"][2])

    Tk = key.shape[1]
    q3 = q2.reshape(B, T, F)
    k3 = k2.reshape(B, Tk, F)
    v3 = v2.reshape(B, Tk, F)

    # TODO(synk): attention masking unsupported (reference default is an empty
    # mask); dropout on attn is a no-op in the reference (p_attn = attn).
    return pallas_flash_attention_out(q3, k3, v3, prep["wo"], prep["bo"], H)


# ---------------------------------------------------------------------------
# Pure-JAX reference (for correctness check)
# ---------------------------------------------------------------------------
def reference(query, key, value, params):
    B, T, F = query.shape
    H = params["n_head"]
    dk = F // H

    def ada(x):
        return params["ada_scale"] * x + params["ada_bias"]

    def split_heads(x):
        return x.reshape(B, -1, H, dk).transpose(0, 2, 1, 3)

    q = split_heads(ada(query) @ params["wq"] + params["bq"])
    k = split_heads(ada(key) @ params["wk"] + params["bk"])
    v = split_heads(ada(value) @ params["wv"] + params["bv"])

    qb = q + params["pos_bias_u"][None, :, None, :]
    scores = jnp.einsum("bhqd,bhkd->bhqk", qb, k) / math.sqrt(dk)
    attn = jax.nn.softmax(scores, axis=-1)
    x = jnp.einsum("bhqk,bhkd->bhqd", attn, v)
    x = x.transpose(0, 2, 1, 3).reshape(B, -1, F)
    return x @ params["wo"] + params["bo"]


if __name__ == "__main__":
    B, T, H, F = 2, 8, 4, 32
    root = jax.random.PRNGKey(0)
    k_q, k_k, k_v, k_p = jax.random.split(root, 4)

    params = init_params(k_p, H, F)
    # Make ada params non-trivial so the folding path is actually exercised.
    params["ada_scale"] = 1.0 + 0.1 * jax.random.normal(
        jax.random.PRNGKey(7), (1, 1, F), jnp.float32)
    params["ada_bias"] = 0.1 * jax.random.normal(
        jax.random.PRNGKey(8), (1, 1, F), jnp.float32)

    # Weight folding / stacking hoisted out of the per-call path: done once here.
    prep = prepare_params(params)

    # Path 1: self-attention (query is key is value) -> fused single-x QKV kernel.
    x = jax.random.normal(k_q, (B, T, F), jnp.float32)
    out_self = jax.block_until_ready(multi_headed_attention(x, x, x, prep))
    ref_self = reference(x, x, x, params)
    err_self = jnp.max(jnp.abs(out_self - ref_self))
    assert out_self.shape == (B, T, F)
    assert jnp.allclose(out_self, ref_self, atol=2e-3, rtol=2e-3), (
        f"self-attn max abs err {err_self}")

    # Path 2: distinct query / key / value -> per-input projection kernels.
    query = jax.random.normal(k_q, (B, T, F), jnp.float32)
    key_in = jax.random.normal(k_k, (B, T, F), jnp.float32)
    value = jax.random.normal(k_v, (B, T, F), jnp.float32)
    out = jax.block_until_ready(
        multi_headed_attention(query, key_in, value, prep))
    ref = reference(query, key_in, value, params)
    err = jnp.max(jnp.abs(out - ref))
    assert out.shape == (B, T, F)
    assert jnp.allclose(out, ref, atol=2e-3, rtol=2e-3), (
        f"cross-attn max abs err {err}")

    print("KERNEL_OK")
</pallas_src>

<mosaic_0001>
module attributes {stable_mosaic.version = 11 : i64} {
  func.func @_qkv_fullk_kernel(%arg0: i32, %arg1: i32, %arg2: memref<16x32xf32, #tpu.memory_space<vmem>>, %arg3: memref<3x32x32xf32, #tpu.memory_space<vmem>>, %arg4: memref<3x1x32xf32, #tpu.memory_space<vmem>>, %arg5: memref<16x32xf32, #tpu.memory_space<vmem>>, %arg6: memref<16x32xf32, #tpu.memory_space<vmem>>, %arg7: memref<16x32xf32, #tpu.memory_space<vmem>>) attributes {dimension_semantics = [#tpu.dimension_semantics<parallel>, #tpu.dimension_semantics<parallel>], iteration_bounds = array<i64: 1, 1>, scalar_prefetch = 0 : i64, scratch_operands = 0 : i64, tpu.core_type = #tpu.core_type<tc>, window_params = [{transform_indices = @transform_0, window_bounds = array<i64: 16, 32>}, {transform_indices = @transform_1, window_bounds = array<i64: 3, 32, 32>}, {transform_indices = @transform_2, window_bounds = array<i64: 3, 1, 32>}, {transform_indices = @transform_3, window_bounds = array<i64: 16, 32>}, {transform_indices = @transform_4, window_bounds = array<i64: 16, 32>}, {transform_indices = @transform_5, window_bounds = array<i64: 16, 32>}]} {
    %c0 = arith.constant 0 : index
    %c0_0 = arith.constant 0 : index
    %0 = vector.load %arg2[%c0, %c0_0] : memref<16x32xf32, #tpu.memory_space<vmem>>, vector<16x32xf32>
    %c0_1 = arith.constant 0 : index
    %c0_2 = arith.constant 0 : index
    %c0_3 = arith.constant 0 : index
    %1 = vector.load %arg4[%c0_1, %c0_2, %c0_3] : memref<3x1x32xf32, #tpu.memory_space<vmem>>, vector<3x1x32xf32>
    %c0_4 = arith.constant 0 : index
    %c0_5 = arith.constant 0 : index
    %c0_6 = arith.constant 0 : index
    %2 = vector.load %arg3[%c0_4, %c0_5, %c0_6] : memref<3x32x32xf32, #tpu.memory_space<vmem>>, vector<1x32x32xf32>
    %3 = vector.shape_cast %2 : vector<1x32x32xf32> to vector<32x32xf32>
    %cst = arith.constant dense<0.000000e+00> : vector<16x32xf32>
    %4 = tpu.matmul %0, %3, %cst {dimension_numbers = #tpu.dot_dimension_numbers<[1], [0], [0], [1], [0, 0, 1, 1], [], []>} : vector<16x32xf32>, vector<32x32xf32>, vector<16x32xf32> -> vector<16x32xf32>
    %5 = vector.extract_strided_slice %1 {offsets = [0, 0, 0], sizes = [1, 1, 32], strides = [1, 1, 1]} : vector<3x1x32xf32> to vector<1x1x32xf32>
    %6 = vector.shape_cast %5 : vector<1x1x32xf32> to vector<1x32xf32>
    %7 = vector.broadcast %6 : vector<1x32xf32> to vector<16x32xf32>
    %8 = arith.addf %4, %7 : vector<16x32xf32>
    %c0_7 = arith.constant 0 : index
    %c0_8 = arith.constant 0 : index
    %9 = vector.load %arg5[%c0_7, %c0_8] : memref<16x32xf32, #tpu.memory_space<vmem>>, vector<16x32xf32>
    tpu.vector_store %arg5[%c0_7, %c0_8], %8 {strides = array<i32>} : memref<16x32xf32, #tpu.memory_space<vmem>>, vector<16x32xf32>,
    %c1 = arith.constant 1 : index
    %c0_9 = arith.constant 0 : index
    %c0_10 = arith.constant 0 : index
    %10 = vector.load %arg3[%c1, %c0_9, %c0_10] : memref<3x32x32xf32, #tpu.memory_space<vmem>>, vector<1x32x32xf32>
    %11 = vector.shape_cast %10 : vector<1x32x32xf32> to vector<32x32xf32>
    %cst_11 = arith.constant dense<0.000000e+00> : vector<16x32xf32>
    %12 = tpu.matmul %0, %11, %cst_11 {dimension_numbers = #tpu.dot_dimension_numbers<[1], [0], [0], [1], [0, 0, 1, 1], [], []>} : vector<16x32xf32>, vector<32x32xf32>, vector<16x32xf32> -> vector<16x32xf32>
    %13 = vector.extract_strided_slice %1 {offsets = [1, 0, 0], sizes = [1, 1, 32], strides = [1, 1, 1]} : vector<3x1x32xf32> to vector<1x1x32xf32>
    %14 = vector.shape_cast %13 : vector<1x1x32xf32> to vector<1x32xf32>
    %15 = vector.broadcast %14 : vector<1x32xf32> to vector<16x32xf32>
    %16 = arith.addf %12, %15 : vector<16x32xf32>
    %c0_12 = arith.constant 0 : index
    %c0_13 = arith.constant 0 : index
    %17 = vector.load %arg6[%c0_12, %c0_13] : memref<16x32xf32, #tpu.memory_space<vmem>>, vector<16x32xf32>
    tpu.vector_store %arg6[%c0_12, %c0_13], %16 {strides = array<i32>} : memref<16x32xf32, #tpu.memory_space<vmem>>, vector<16x32xf32>,
    %c2 = arith.constant 2 : index
    %c0_14 = arith.constant 0 : index
    %c0_15 = arith.constant 0 : index
    %18 = vector.load %arg3[%c2, %c0_14, %c0_15] : memref<3x32x32xf32, #tpu.memory_space<vmem>>, vector<1x32x32xf32>
    %19 = vector.shape_cast %18 : vector<1x32x32xf32> to vector<32x32xf32>
    %cst_16 = arith.constant dense<0.000000e+00> : vector<16x32xf32>
    %20 = tpu.matmul %0, %19, %cst_16 {dimension_numbers = #tpu.dot_dimension_numbers<[1], [0], [0], [1], [0, 0, 1, 1], [], []>} : vector<16x32xf32>, vector<32x32xf32>, vector<16x32xf32> -> vector<16x32xf32>
    %21 = vector.extract_strided_slice %1 {offsets = [2, 0, 0], sizes = [1, 1, 32], strides = [1, 1, 1]} : vector<3x1x32xf32> to vector<1x1x32xf32>
    %22 = vector.shape_cast %21 : vector<1x1x32xf32> to vector<1x32xf32>
    %23 = vector.broadcast %22 : vector<1x32xf32> to vector<16x32xf32>
    %24 = arith.addf %20, %23 : vector<16x32xf32>
    %c0_17 = arith.constant 0 : index
    %c0_18 = arith.constant 0 : index
    %25 = vector.load %arg7[%c0_17, %c0_18] : memref<16x32xf32, #tpu.memory_space<vmem>>, vector<16x32xf32>
    tpu.vector_store %arg7[%c0_17, %c0_18], %24 {strides = array<i32>} : memref<16x32xf32, #tpu.memory_space<vmem>>, vector<16x32xf32>,
    return
  }
  func.func @transform_0(%arg0: i32, %arg1: i32) -> (i32, i32) {
    %c0_i32 = arith.constant 0 : i32
    %c0_i32_0 = arith.constant 0 : i32
    return %arg1, %c0_i32 : i32, i32
  }
  func.func @transform_1(%arg0: i32, %arg1: i32) -> (i32, i32, i32) {
    %c0_i32 = arith.constant 0 : i32
    %c0_i32_0 = arith.constant 0 : i32
    %c0_i32_1 = arith.constant 0 : i32
    return %c0_i32, %c0_i32_0, %arg0 : i32, i32, i32
  }
  func.func @transform_2(%arg0: i32, %arg1: i32) -> (i32, i32, i32) {
    %c0_i32 = arith.constant 0 : i32
    %c0_i32_0 = arith.constant 0 : i32
    %c0_i32_1 = arith.constant 0 : i32
    return %c0_i32, %c0_i32_0, %arg0 : i32, i32, i32
  }
  func.func @transform_3(%arg0: i32, %arg1: i32) -> (i32, i32) {
    %c0_i32 = arith.constant 0 : i32
    return %arg1, %arg0 : i32, i32
  }
  func.func @transform_4(%arg0: i32, %arg1: i32) -> (i32, i32) {
    %c0_i32 = arith.constant 0 : i32
    return %arg1, %arg0 : i32, i32
  }
  func.func @transform_5(%arg0: i32, %arg1: i32) -> (i32, i32) {
    %c0_i32 = arith.constant 0 : i32
    return %arg1, %arg0 : i32, i32
  }
}

</mosaic_0001>

<llo_original>
// kernel: tpu_custom_call.1
$region0: #{tpu_custom_call.1}
  #allocation0 [shape = 'u32[]', space=smem, size = 0x4, offset = 0x4, fixed_abs, tag = 'smem constant byte address 0x4 - core index']
  #allocation1 [shape = 'u32[144,128]{1,0:T(1,128)}', space=vmem, size = 0x12000, scoped, tag = 'internal scratch']
  %s0 = inlined_call_operand.hbm [shape: f32[16,32], index: 0, kind: input, shape index: {}]
  %s1 = inlined_call_operand.hbm [shape: f32[3,32,32], index: 1, kind: input, shape index: {}]
  %s2 = inlined_call_operand.vmem [shape: f32[3,1,32], index: 2, kind: input, shape index: {}]
  %s3 = inlined_call_operand.hbm [shape: f32[16,32], index: 3, kind: output, shape index: {0}]
  %s4 = inlined_call_operand.hbm [shape: f32[16,32], index: 4, kind: output, shape index: {1}]
  %s5 = inlined_call_operand.hbm [shape: f32[16,32], index: 5, kind: output, shape index: {2}]
  %6 = xla_tuple %s3, %s4, %s5
  %s7 = sld [smem:[#allocation0]]
  $region46: #{tpu_custom_call.1} parent=0
    _
  %s9 = ssub.s32 1, %s7
  %s10 = scalar_select 0, %s9, %s7
  $region1: #{tpu_custom_call.1} parent=0
    #allocation2 [shape = 'u8[8192]{0}', space=vmem, size = 0x2000, scoped, tag = 'input window, operand 0, single buffered']
    #allocation3 [shape = 's32[1]{0}', space=sflag, size = 0x4, scoped, tag = 'scoped memory for tpu_custom_call.1']
    #allocation4 [shape = 's32[1]{0}', space=sflag, size = 0x4, scoped, tag = 'scoped memory for tpu_custom_call.1']
    #allocation5 [shape = 'u8[49152]{0}', space=vmem, size = 0xc000, scoped, tag = 'input window, operand 1, single buffered']
    #allocation6 [shape = 's32[1]{0}', space=sflag, size = 0x4, scoped, tag = 'scoped memory for tpu_custom_call.1']
    #allocation7 [shape = 'u8[8192]{0}', space=vmem, size = 0x2000, scoped, tag = 'output window, operand 0, single buffered']
    #allocation8 [shape = 'u8[8192]{0}', space=vmem, size = 0x2000, scoped, tag = 'output window, operand 1, single buffered']
    #allocation9 [shape = 's32[1]{0}', space=sflag, size = 0x4, scoped, tag = 'scoped memory for tpu_custom_call.1']
    #allocation10 [shape = 'u8[8192]{0}', space=vmem, size = 0x2000, scoped, tag = 'output window, operand 2, single buffered']
    %11 = vsyncpa [#allocation3], 0
    %12 = vsyncpa [#allocation6], 0
    %13 = vsyncpa [#allocation4], 0
    %14 = vsyncpa [#allocation9], 0
    // Predicated region
    $region2: #{tpu_custom_call.1} parent=1 // pred_check
      _
    $region3: #{tpu_custom_call.1} parent=1 // pred_check_branch
      %16 = sbr.rel (0) target = $region5
    $region4: #{tpu_custom_call.1} parent=1 // pred_region
      %s18 = ssub.s32 256, 256
      %19 = vsyncadd [#allocation3], %s18
      %s20 = sshll.u32 [#allocation2], 4
      %s21 = int_to_ptr.vmem [resolvable:$true] %s20
      %26 = dma.hbm_to_vmem [thread:$0]  %s0, 256, %s21, [#allocation3], 128, 128, 8
    $region5: #{tpu_custom_call.1} parent=1 // pred_fallthru
      _
    // Predicated region
    $region6: #{tpu_custom_call.1} parent=1 // pred_check
      _
    $region7: #{tpu_custom_call.1} parent=1 // pred_check_branch
      %28 = sbr.rel (0) target = $region9
    $region8: #{tpu_custom_call.1} parent=1 // pred_region
      %s30 = ssub.s32 1536, 1536
      %31 = vsyncadd [#allocation6], %s30
      %s32 = sshll.u32 [#allocation5], 4
      %s33 = int_to_ptr.vmem [resolvable:$true] %s32
      %38 = dma.hbm_to_vmem [thread:$0]  %s1, 1536, %s33, [#allocation6], 128, 128, 8
    $region9: #{tpu_custom_call.1} parent=1 // pred_fallthru
      _
    // Predicated region
    $region10: #{tpu_custom_call.1} parent=1 // pred_check
      _
    $region11: #{tpu_custom_call.1} parent=1 // pred_check_branch
      %40 = sbr.rel (0) target = $region13
    $region12: #{tpu_custom_call.1} parent=1 // pred_region
      _
    $region13: #{tpu_custom_call.1} parent=1 // pred_fallthru
      _
    // Predicated region
    $region14: #{tpu_custom_call.1} parent=1 // pred_check
      _
    $region15: #{tpu_custom_call.1} parent=1 // pred_check_branch
      %42 = sbr.rel (0) target = $region17
    $region16: #{tpu_custom_call.1} parent=1 // pred_region
      %43 = dma.done [#allocation3], 256
    $region17: #{tpu_custom_call.1} parent=1 // pred_fallthru
      _
    // Predicated region
    $region18: #{tpu_custom_call.1} parent=1 // pred_check
      _
    $region19: #{tpu_custom_call.1} parent=1 // pred_check_branch
      %45 = sbr.rel (0) target = $region21
    $region20: #{tpu_custom_call.1} parent=1 // pred_region
      %46 = dma.done [#allocation6], 1536
    $region21: #{tpu_custom_call.1} parent=1 // pred_fallthru
      _
    %v47 = vld [vmem:[#allocation2] sm:$0xff]
    %v48 = vld [vmem:[#allocation2 + $0x8] sm:$0xff]
    %v49 = vld [vmem:[%s2] sm:$0x1]
    %v50 = vld [vmem:[%s2 + $0x1] sm:$0x1]
    %v51 = vld [vmem:[%s2 + $0x2] sm:$0x1]
    %v52 = vld [vmem:[#allocation5] sm:$0xff]
    %v53 = vld [vmem:[#allocation5 + $0x8] sm:$0xff]
    %v54 = vld [vmem:[#allocation5 + $0x10] sm:$0xff]
    %v55 = vld [vmem:[#allocation5 + $0x18] sm:$0xff]
    %v57 = vlaneseq
    %v58 = vshrl.u32 %v57, 7
    %v59 = vsub.s32 0, %v58
    %v60 = vrot.slane %v49, %v59
    %vm62 = vcmask 261120
    %v64 = vsel %vm62, %v47, 0
    %v67 = vsel %vm62, %v48, 0
    %69 = vmatprep.subr.mxu0 0.0
    %70 = vmatpush1.msra.mxu0 %v52
    %71 = vmatprep.subr.mxu0 0.0
    %72 = vmatpush1.msra.mxu0 %v53
    %73 = vmatprep.subr.mxu0 0.0
    %74 = vmatpush1.msra.mxu0 %v54
    %75 = vmatprep.subr.mxu0 0.0
    %76 = vmatpush1.msra.mxu0 %v55
    %77 = vmatprep.subr.mxu0 0.0
    %78 = vmatpush1.msra.mxu0 0.0
    %79 = vmatprep.subr.mxu0 0.0
    %80 = vmatpush1.msra.mxu0 0.0
    %81 = vmatprep.subr.mxu0 0.0
    %82 = vmatpush1.msra.mxu0 0.0
    %83 = vmatprep.subr.mxu0 0.0
    %84 = vmatpush1.msra.mxu0 0.0
    %85 = vmatprep.subr.mxu0 0.0
    %86 = vmatpush1.msra.mxu0 0.0
    %87 = vmatprep.subr.mxu0 0.0
    %88 = vmatpush1.msra.mxu0 0.0
    %89 = vmatprep.subr.mxu0 0.0
    %90 = vmatpush1.msra.mxu0 0.0
    %91 = vmatprep.subr.mxu0 0.0
    %92 = vmatpush1.msra.mxu0 0.0
    %93 = vmatprep.subr.mxu0 0.0
    %94 = vmatpush1.msra.mxu0 0.0
    %95 = vmatprep.subr.mxu0 0.0
    %96 = vmatpush1.msra.mxu0 0.0
    %97 = vmatprep.subr.mxu0 0.0
    %98 = vmatpush1.msra.mxu0 0.0
    %99 = vmatprep.subr.mxu0 0.0
    %100 = vmatpush1.msra.mxu0 0.0
    %101 = vmatprep.subr.mxu0 0.0
    %102 = vmatpush1.msra.mxu0 0.0
    %103 = vmatprep.subr.mxu0 0.0
    %104 = vmatpush1.msra.mxu0 0.0
    %105 = vmatprep.subr.mxu0 0.0
    %106 = vmatpush1.msra.mxu0 0.0
    %107 = vmatprep.subr.mxu0 0.0
    %108 = vmatpush1.msra.mxu0 0.0
    %109 = vmatprep.subr.mxu0 0.0
    %110 = vmatpush1.msra.mxu0 0.0
    %111 = vmatprep.subr.mxu0 0.0
    %112 = vmatpush1.msra.mxu0 0.0
    %113 = vmatprep.subr.mxu0 0.0
    %114 = vmatpush1.msra.mxu0 0.0
    %115 = vmatprep.subr.mxu0 0.0
    %116 = vmatpush1.msra.mxu0 0.0
    %117 = vmatprep.subr.mxu0 0.0
    %118 = vmatpush1.msra.mxu0 0.0
    %119 = vmatprep.subr.mxu0 0.0
    %120 = vmatpush1.msra.mxu0 0.0
    %121 = vmatprep.subr.mxu0 0.0
    %122 = vmatpush1.msra.mxu0 0.0
    %123 = vmatprep.subr.mxu0 0.0
    %124 = vmatpush1.msra.mxu0 0.0
    %125 = vmatprep.subr.mxu0 0.0
    %126 = vmatpush1.msra.mxu0 0.0
    %127 = vmatprep.subr.mxu0 0.0
    %128 = vmatpush1.msra.mxu0 0.0
    %129 = vmatprep.subr.mxu0 0.0
    %130 = vmatpush1.msra.mxu0 0.0
    %131 = vmatprep.subr.mxu0 0.0
    %132 = vmatpush1.msra.mxu0 0.0
    %133 = vmatprep.mubr.f32.mxu0 0.0
    %134 = vmatmul.mubr.f32.gmra.mrb[0].mxu0 %v64
    %v135 = vpop.f32.mrb[0].mxu0
    %v136 = vadd.f32 %v60, %v135
    %v137 = vpop.f32.mrb[0].mxu0
    %138 = vmatprep.mubr.f32.mxu0 0.0
    %139 = vmatmul.mubr.f32.gmra.mrb[0].mxu0 %v67
    %v140 = vpop.f32.mrb[0].mxu0
    %v141 = vadd.f32 %v60, %v140
    %v142 = vpop.f32.mrb[0].mxu0
    %143 = vdwg.mxu0
    %144 = vst.msk [vmem:[#allocation7] sm:$0xff] %vm62, %v136
    %145 = vst.msk [vmem:[#allocation7 + $0x8] sm:$0xff] %vm62, %v141
    %s146 = scalar_lea.vmem [#allocation5], 32
    %v147 = vld [vmem:[%s146] sm:$0xff]
    %v148 = vld [vmem:[%s146 + $0x8] sm:$0xff]
    %v149 = vld [vmem:[%s146 + $0x10] sm:$0xff]
    %v150 = vld [vmem:[%s146 + $0x18] sm:$0xff]
    %v152 = vlaneseq
    %v153 = vshrl.u32 %v152, 7
    %v154 = vsub.s32 0, %v153
    %v155 = vrot.slane %v50, %v154
    %157 = vmatprep.subr.mxu0 0.0
    %158 = vmatpush1.msra.mxu0 %v147
    %159 = vmatprep.subr.mxu0 0.0
    %160 = vmatpush1.msra.mxu0 %v148
    %161 = vmatprep.subr.mxu0 0.0
    %162 = vmatpush1.msra.mxu0 %v149
    %163 = vmatprep.subr.mxu0 0.0
    %164 = vmatpush1.msra.mxu0 %v150
    %165 = vmatprep.subr.mxu0 0.0
    %166 = vmatpush1.msra.mxu0 0.0
    %167 = vmatprep.subr.mxu0 0.0
    %168 = vmatpush1.msra.mxu0 0.0
    %169 = vmatprep.subr.mxu0 0.0
    %170 = vmatpush1.msra.mxu0 0.0
    %171 = vmatprep.subr.mxu0 0.0
    %172 = vmatpush1.msra.mxu0 0.0
    %173 = vmatprep.subr.mxu0 0.0
    %174 = vmatpush1.msra.mxu0 0.0
    %175 = vmatprep.subr.mxu0 0.0
    %176 = vmatpush1.msra.mxu0 0.0
    %177 = vmatprep.subr.mxu0 0.0
    %178 = vmatpush1.msra.mxu0 0.0
    %179 = vmatprep.subr.mxu0 0.0
    %180 = vmatpush1.msra.mxu0 0.0
    %181 = vmatprep.subr.mxu0 0.0
    %182 = vmatpush1.msra.mxu0 0.0
    %183 = vmatprep.subr.mxu0 0.0
    %184 = vmatpush1.msra.mxu0 0.0
    %185 = vmatprep.subr.mxu0 0.0
    %186 = vmatpush1.msra.mxu0 0.0
    %187 = vmatprep.subr.mxu0 0.0
    %188 = vmatpush1.msra.mxu0 0.0
    %189 = vmatprep.subr.mxu0 0.0
    %190 = vmatpush1.msra.mxu0 0.0
    %191 = vmatprep.subr.mxu0 0.0
    %192 = vmatpush1.msra.mxu0 0.0
    %193 = vmatprep.subr.mxu0 0.0
    %194 = vmatpush1.msra.mxu0 0.0
    %195 = vmatprep.subr.mxu0 0.0
    %196 = vmatpush1.msra.mxu0 0.0
    %197 = vmatprep.subr.mxu0 0.0
    %198 = vmatpush1.msra.mxu0 0.0
    %199 = vmatprep.subr.mxu0 0.0
    %200 = vmatpush1.msra.mxu0 0.0
    %201 = vmatprep.subr.mxu0 0.0
    %202 = vmatpush1.msra.mxu0 0.0
    %203 = vmatprep.subr.mxu0 0.0
    %204 = vmatpush1.msra.mxu0 0.0
    %205 = vmatprep.subr.mxu0 0.0
    %206 = vmatpush1.msra.mxu0 0.0
    %207 = vmatprep.subr.mxu0 0.0
    %208 = vmatpush1.msra.mxu0 0.0
    %209 = vmatprep.subr.mxu0 0.0
    %210 = vmatpush1.msra.mxu0 0.0
    %211 = vmatprep.subr.mxu0 0.0
    %212 = vmatpush1.msra.mxu0 0.0
    %213 = vmatprep.subr.mxu0 0.0
    %214 = vmatpush1.msra.mxu0 0.0
    %215 = vmatprep.subr.mxu0 0.0
    %216 = vmatpush1.msra.mxu0 0.0
    %217 = vmatprep.subr.mxu0 0.0
    %218 = vmatpush1.msra.mxu0 0.0
    %219 = vmatprep.subr.mxu0 0.0
    %220 = vmatpush1.msra.mxu0 0.0
    %221 = vmatprep.mubr.f32.mxu0 0.0
    %222 = vmatmul.mubr.f32.gmra.mrb[0].mxu0 %v64
    %v223 = vpop.f32.mrb[0].mxu0
    %v224 = vadd.f32 %v155, %v223
    %v225 = vpop.f32.mrb[0].mxu0
    %226 = vmatprep.mubr.f32.mxu0 0.0
    %227 = vmatmul.mubr.f32.gmra.mrb[0].mxu0 %v67
    %v228 = vpop.f32.mrb[0].mxu0
    %v229 = vadd.f32 %v155, %v228
    %v230 = vpop.f32.mrb[0].mxu0
    %231 = vdwg.mxu0
    %232 = vst.msk [vmem:[#allocation8] sm:$0xff] %vm62, %v224
    %233 = vst.msk [vmem:[#allocation8 + $0x8] sm:$0xff] %vm62, %v229
    %s234 = scalar_lea.vmem [#allocation5], 64
    %v235 = vld [vmem:[%s234] sm:$0xff]
    %v236 = vld [vmem:[%s234 + $0x8] sm:$0xff]
    %v237 = vld [vmem:[%s234 + $0x10] sm:$0xff]
    %v238 = vld [vmem:[%s234 + $0x18] sm:$0xff]
    %v240 = vlaneseq
    %v241 = vshrl.u32 %v240, 7
    %v242 = vsub.s32 0, %v241
    %v243 = vrot.slane %v51, %v242
    %245 = vmatprep.subr.mxu0 0.0
    %246 = vmatpush1.msra.mxu0 %v235
    %247 = vmatprep.subr.mxu0 0.0
    %248 = vmatpush1.msra.mxu0 %v236
    %249 = vmatprep.subr.mxu0 0.0
    %250 = vmatpush1.msra.mxu0 %v237
    %251 = vmatprep.subr.mxu0 0.0
    %252 = vmatpush1.msra.mxu0 %v238
    %253 = vmatprep.subr.mxu0 0.0
    %254 = vmatpush1.msra.mxu0 0.0
    %255 = vmatprep.subr.mxu0 0.0
    %256 = vmatpush1.msra.mxu0 0.0
    %257 = vmatprep.subr.mxu0 0.0
    %258 = vmatpush1.msra.mxu0 0.0
    %259 = vmatprep.subr.mxu0 0.0
    %260 = vmatpush1.msra.mxu0 0.0
    %261 = vmatprep.subr.mxu0 0.0
    %262 = vmatpush1.msra.mxu0 0.0
    %263 = vmatprep.subr.mxu0 0.0
    %264 = vmatpush1.msra.mxu0 0.0
    %265 = vmatprep.subr.mxu0 0.0
    %266 = vmatpush1.msra.mxu0 0.0
    %267 = vmatprep.subr.mxu0 0.0
    %268 = vmatpush1.msra.mxu0 0.0
    %269 = vmatprep.subr.mxu0 0.0
    %270 = vmatpush1.msra.mxu0 0.0
    %271 = vmatprep.subr.mxu0 0.0
    %272 = vmatpush1.msra.mxu0 0.0
    %273 = vmatprep.subr.mxu0 0.0
    %274 = vmatpush1.msra.mxu0 0.0
    %275 = vmatprep.subr.mxu0 0.0
    %276 = vmatpush1.msra.mxu0 0.0
    %277 = vmatprep.subr.mxu0 0.0
    %278 = vmatpush1.msra.mxu0 0.0
    %279 = vmatprep.subr.mxu0 0.0
    %280 = vmatpush1.msra.mxu0 0.0
    %281 = vmatprep.subr.mxu0 0.0
    %282 = vmatpush1.msra.mxu0 0.0
    %283 = vmatprep.subr.mxu0 0.0
    %284 = vmatpush1.msra.mxu0 0.0
    %285 = vmatprep.subr.mxu0 0.0
    %286 = vmatpush1.msra.mxu0 0.0
    %287 = vmatprep.subr.mxu0 0.0
    %288 = vmatpush1.msra.mxu0 0.0
    %289 = vmatprep.subr.mxu0 0.0
    %290 = vmatpush1.msra.mxu0 0.0
    %291 = vmatprep.subr.mxu0 0.0
    %292 = vmatpush1.msra.mxu0 0.0
    %293 = vmatprep.subr.mxu0 0.0
    %294 = vmatpush1.msra.mxu0 0.0
    %295 = vmatprep.subr.mxu0 0.0
    %296 = vmatpush1.msra.mxu0 0.0
    %297 = vmatprep.subr.mxu0 0.0
    %298 = vmatpush1.msra.mxu0 0.0
    %299 = vmatprep.subr.mxu0 0.0
    %300 = vmatpush1.msra.mxu0 0.0
    %301 = vmatprep.subr.mxu0 0.0
    %302 = vmatpush1.msra.mxu0 0.0
    %303 = vmatprep.subr.mxu0 0.0
    %304 = vmatpush1.msra.mxu0 0.0
    %305 = vmatprep.subr.mxu0 0.0
    %306 = vmatpush1.msra.mxu0 0.0
    %307 = vmatprep.subr.mxu0 0.0
    %308 = vmatpush1.msra.mxu0 0.0
    %309 = vmatprep.mubr.f32.mxu0 0.0
    %310 = vmatmul.mubr.f32.gmra.mrb[0].mxu0 %v64
    %v311 = vpop.f32.mrb[0].mxu0
    %v312 = vadd.f32 %v243, %v311
    %v313 = vpop.f32.mrb[0].mxu0
    %314 = vmatprep.mubr.f32.mxu0 0.0
    %315 = vmatmul.mubr.f32.gmra.mrb[0].mxu0 %v67
    %v316 = vpop.f32.mrb[0].mxu0
    %v317 = vadd.f32 %v243, %v316
    %v318 = vpop.f32.mrb[0].mxu0
    %319 = vdwg.mxu0
    %320 = vst.msk [vmem:[#allocation10] sm:$0xff] %vm62, %v312
    %321 = vst.msk [vmem:[#allocation10 + $0x8] sm:$0xff] %vm62, %v317
    // Predicated region
    $region22: #{tpu_custom_call.1} parent=1 // pred_check
      _
    $region23: #{tpu_custom_call.1} parent=1 // pred_check_branch
      %323 = sbr.rel (0) target = $region25
    $region24: #{tpu_custom_call.1} parent=1 // pred_region
      %s325 = ssub.s32 256, 256
      %326 = vsyncadd [#allocation4], %s325
      %s327 = sshll.u32 [#allocation7], 4
      %s328 = int_to_ptr.vmem [resolvable:$true] %s327
      %333 = dma.vmem_to_hbm [thread:$0]  %s328, 256, %s3, [#allocation4], 128, 128, 8
    $region25: #{tpu_custom_call.1} parent=1 // pred_fallthru
      _
    // Predicated region
    $region26: #{tpu_custom_call.1} parent=1 // pred_check
      _
    $region27: #{tpu_custom_call.1} parent=1 // pred_check_branch
      %335 = sbr.rel (0) target = $region29
    $region28: #{tpu_custom_call.1} parent=1 // pred_region
      %s337 = ssub.s32 256, 256
      %338 = vsyncadd [#allocation9], %s337
      %s339 = sshll.u32 [#allocation8], 4
      %s340 = int_to_ptr.vmem [resolvable:$true] %s339
      %345 = dma.vmem_to_hbm [thread:$0]  %s340, 256, %s4, [#allocation9], 128, 128, 8
    $region29: #{tpu_custom_call.1} parent=1 // pred_fallthru
      _
    // Predicated region
    $region30: #{tpu_custom_call.1} parent=1 // pred_check
      _
    $region31: #{tpu_custom_call.1} parent=1 // pred_check_branch
      %347 = sbr.rel (0) target = $region33
    $region32: #{tpu_custom_call.1} parent=1 // pred_region
      %s349 = ssub.s32 256, 256
      %350 = vsyncadd [#allocation9], %s349
      %s351 = sshll.u32 [#allocation10], 4
      %s352 = int_to_ptr.vmem [resolvable:$true] %s351
      %357 = dma.vmem_to_hbm [thread:$0]  %s352, 256, %s5, [#allocation9], 128, 128, 8
    $region33: #{tpu_custom_call.1} parent=1 // pred_fallthru
      _
    // Predicated region
    $region34: #{tpu_custom_call.1} parent=1 // pred_check
      _
    $region35: #{tpu_custom_call.1} parent=1 // pred_check_branch
      %359 = sbr.rel (0) target = $region37
    $region36: #{tpu_custom_call.1} parent=1 // pred_region
      %360 = dma.done [#allocation4], 256
    $region37: #{tpu_custom_call.1} parent=1 // pred_fallthru
      _
    // Predicated region
    $region38: #{tpu_custom_call.1} parent=1 // pred_check
      _
    $region39: #{tpu_custom_call.1} parent=1 // pred_check_branch
      %362 = sbr.rel (0) target = $region41
    $region40: #{tpu_custom_call.1} parent=1 // pred_region
      %363 = dma.done [#allocation9], 256
    $region41: #{tpu_custom_call.1} parent=1 // pred_fallthru
      _
    // Predicated region
    $region42: #{tpu_custom_call.1} parent=1 // pred_check
      _
    $region43: #{tpu_custom_call.1} parent=1 // pred_check_branch
      %365 = sbr.rel (0) target = $region45
    $region44: #{tpu_custom_call.1} parent=1 // pred_region
      %366 = dma.done [#allocation9], 256
    $region45: #{tpu_custom_call.1} parent=1 // pred_fallthru
      _
    %367 = vsyncpa [#allocation3], 1
    %368 = vsyncpa [#allocation6], 1
    %369 = vsyncpa [#allocation4], 1
    %370 = vsyncpa [#allocation9], 1

</llo_original>
